<compile_context>
chip_gen: v7x
topology: tpu7x:2x2x1
jax: 0.10.0
libtpu: 0.0.40
codegen_flags: <defaults>
</compile_context>

<pallas_src>
from functools import partial

import jax
import jax.numpy as jnp
import numpy as np
from jax.experimental import pallas as pl
from jax.experimental.pallas import tpu as pltpu

_PACK = 8  # rows packed per GEMM row (sublane packing factor)


def _mha_packed_kernel(x_ref, w_ref, b_ref, o_ref):
    """One packed row-tile of: out = x @ W_blk + b_blk.

    x_ref : (tg, PACK*dk)      VMEM  packed row tile of the flattened input
    w_ref : (PACK*dk, PACK*do) VMEM  block-diagonal folded weight (resident)
    b_ref : (1, PACK*do)       VMEM  tiled bias (resident)
    o_ref : (tg, PACK*do)      VMEM  packed output tile (== (PACK*tg, do) row-major)
    """
    acc = jnp.dot(x_ref[...], w_ref[...], preferred_element_type=jnp.float32)
    o_ref[...] = (acc + b_ref[...]).astype(o_ref.dtype)


@partial(jax.jit, static_argnames=("num_heads", "tm"))
def multi_head_attention_forward(x, weight, bias, *, num_heads: int, tm: int = 8192):
    """x: (B, T, V, dim_k); weight: (dim_in, num_heads*dim_k); bias: (dim_in,)."""
    B, T, V, dk = x.shape
    dim_in = weight.shape[0]
    assert weight.shape[1] == num_heads * dk

    # Fold the head concatenation into the weight:
    #   concat([x]*H, -1) @ W^T  ==  x @ (sum over heads of W_h)^T
    w_fold_t = weight.reshape(dim_in, num_heads, dk).sum(axis=1).T        # (dk, dim_in)
    # Block-diagonal packing: 8 rows of x become one GEMM row of width 8*dk.
    w_blk = jnp.kron(jnp.eye(_PACK, dtype=w_fold_t.dtype), w_fold_t)      # (8*dk, 8*dim_in)
    b_blk = jnp.tile(bias, _PACK).reshape(1, _PACK * dim_in)              # (1, 8*dim_in)

    M = B * T * V
    x_flat = x.reshape(M, dk)
    pad8 = (-M) % _PACK                     # <= 7 rows; 0 for the demo shapes
    if pad8:
        x_flat = jnp.pad(x_flat, ((0, pad8), (0, 0)))
    G = (M + pad8) // _PACK                 # number of packed row-groups
    x_packed = x_flat.reshape(G, _PACK * dk)

    # --- tile sizing -------------------------------------------------------
    # Requested groups/tile from tm rows (multiple of 8 for sublane alignment).
    tg_req = max(_PACK, ((tm // _PACK) // _PACK) * _PACK)
    # Keep >= ~4 tiles when possible (megacore sharding on v7x), but never let a
    # tile drop below 64 groups (512 rows) -- per-step overhead amortization.
    tg_4tiles = max(64, _PACK * pl.cdiv(pl.cdiv(G, 4), _PACK))
    g_ceil = _PACK * pl.cdiv(G, _PACK)      # don't exceed the (rounded) array extent
    tg = max(_PACK, min(tg_req, tg_4tiles, g_ceil))
    n_tiles = pl.cdiv(G, tg)                # ragged last block handled by Pallas masking

    kw = _PACK * dk
    kn = _PACK * dim_in
    bytes_accessed = 4 * (G * kw + G * kn + kw * kn + kn)

    out_packed = pl.pallas_call(
        _mha_packed_kernel,
        out_shape=jax.ShapeDtypeStruct((G, kn), x.dtype),
        grid_spec=pltpu.PrefetchScalarGridSpec(
            num_scalar_prefetch=0,
            grid=(n_tiles,),
            in_specs=[
                pl.BlockSpec((tg, kw), lambda i: (i, 0)),   # packed x row tile
                pl.BlockSpec((kw, kn), lambda i: (0, 0)),   # block-diag weight (resident)
                pl.BlockSpec((1, kn), lambda i: (0, 0)),    # tiled bias (resident)
            ],
            out_specs=pl.BlockSpec((tg, kn), lambda i: (i, 0)),
        ),
        compiler_params=pltpu.CompilerParams(
            dimension_semantics=("parallel",),
        ),
        cost_estimate=pl.CostEstimate(
            flops=2 * G * kw * kn,
            transcendentals=0,
            bytes_accessed=bytes_accessed,
        ),
    )(x_packed, w_blk, b_blk)

    # (G, 8*dim_in) is exactly the row-major (G*8, dim_in) output: no transpose.
    out_flat = out_packed.reshape(G * _PACK, dim_in)[:M]
    return out_flat.reshape(B, T, V, dim_in)


def _reference(x, weight, bias, num_heads):
    y = jnp.concatenate([x] * num_heads, axis=-1)
    return jnp.einsum("btvk,ok->btvo", y, weight) + bias


if __name__ == "__main__":
    # Module hyper-params: MultiHeadAttention(num_heads, dim_in, dim_k, ...)
    num_heads = 4
    dim_in = 16
    dim_k = 32          # x's last dim must equal num_heads*dim_k / num_heads for the Linear
    B, T, V = 2, 8, 4   # batch, time steps, graph vertices

    key = jax.random.PRNGKey(0)
    kx, kw, kb = jax.random.split(key, 3)

    x = jax.random.normal(kx, (B, T, V, dim_k), dtype=jnp.float32)

    # Deterministic Linear(num_heads*dim_k -> dim_in) parameters (PyTorch-style uniform init).
    fan_in = num_heads * dim_k
    bound = 1.0 / np.sqrt(fan_in)
    weight = jax.random.uniform(kw, (dim_in, fan_in), jnp.float32, -bound, bound)
    bias = jax.random.uniform(kb, (dim_in,), jnp.float32, -bound, bound)

    # TODO(synk): AttentionHead's conv projections + continual-attention state
    # (forward_steps / forward_step path) are not exercised by the module's
    # forward(), so they are intentionally not implemented here.

    out = multi_head_attention_forward(x, weight, bias, num_heads=num_heads)
    out = jax.block_until_ready(out)

    ref = _reference(x, weight, bias, num_heads)
    np.testing.assert_allclose(np.asarray(out), np.asarray(ref), rtol=1e-5, atol=1e-5)

    print("KERNEL_OK")
</pallas_src>

<mosaic_0001>
module attributes {stable_mosaic.version = 11 : i64} {
  func.func @_mha_packed_kernel(%arg0: i32, %arg1: memref<8x256xf32, #tpu.memory_space<vmem>>, %arg2: memref<256x128xf32, #tpu.memory_space<vmem>>, %arg3: memref<1x128xf32, #tpu.memory_space<vmem>>, %arg4: memref<8x128xf32, #tpu.memory_space<vmem>>) attributes {dimension_semantics = [#tpu.dimension_semantics<parallel>], iteration_bounds = array<i64: 1>, scalar_prefetch = 0 : i64, scratch_operands = 0 : i64, tpu.core_type = #tpu.core_type<tc>, window_params = [{transform_indices = @transform_0, window_bounds = array<i64: 8, 256>}, {pipeline_mode = #tpu.pipeline_mode<synchronous>, transform_indices = @transform_1, window_bounds = array<i64: 256, 128>}, {pipeline_mode = #tpu.pipeline_mode<synchronous>, transform_indices = @transform_2, window_bounds = array<i64: 1, 128>}, {transform_indices = @transform_3, window_bounds = array<i64: 8, 128>}]} {
    %c0 = arith.constant 0 : index
    %c0_0 = arith.constant 0 : index
    %0 = vector.load %arg1[%c0, %c0_0] : memref<8x256xf32, #tpu.memory_space<vmem>>, vector<8x256xf32>
    %c0_1 = arith.constant 0 : index
    %c0_2 = arith.constant 0 : index
    %1 = vector.load %arg2[%c0_1, %c0_2] : memref<256x128xf32, #tpu.memory_space<vmem>>, vector<256x128xf32>
    %cst = arith.constant dense<0.000000e+00> : vector<8x128xf32>
    %2 = tpu.matmul %0, %1, %cst {dimension_numbers = #tpu.dot_dimension_numbers<[1], [0], [0], [1], [0, 0, 1, 1], [], []>} : vector<8x256xf32>, vector<256x128xf32>, vector<8x128xf32> -> vector<8x128xf32>
    %c0_3 = arith.constant 0 : index
    %c0_4 = arith.constant 0 : index
    %3 = vector.load %arg3[%c0_3, %c0_4] : memref<1x128xf32, #tpu.memory_space<vmem>>, vector<1x128xf32>
    %4 = vector.broadcast %3 : vector<1x128xf32> to vector<8x128xf32>
    %5 = arith.addf %2, %4 : vector<8x128xf32>
    %c0_5 = arith.constant 0 : index
    %c0_6 = arith.constant 0 : index
    %6 = vector.load %arg4[%c0_5, %c0_6] : memref<8x128xf32, #tpu.memory_space<vmem>>, vector<8x128xf32>
    tpu.vector_store %arg4[%c0_5, %c0_6], %5 {strides = array<i32>} : memref<8x128xf32, #tpu.memory_space<vmem>>, vector<8x128xf32>,
    return
  }
  func.func @transform_0(%arg0: i32) -> (i32, i32) {
    %c0_i32 = arith.constant 0 : i32
    %c0_i32_0 = arith.constant 0 : i32
    return %arg0, %c0_i32 : i32, i32
  }
  func.func @transform_1(%arg0: i32) -> (i32, i32) {
    %c0_i32 = arith.constant 0 : i32
    %c0_i32_0 = arith.constant 0 : i32
    %c0_i32_1 = arith.constant 0 : i32
    return %c0_i32, %c0_i32_0 : i32, i32
  }
  func.func @transform_2(%arg0: i32) -> (i32, i32) {
    %c0_i32 = arith.constant 0 : i32
    %c0_i32_0 = arith.constant 0 : i32
    %c0_i32_1 = arith.constant 0 : i32
    return %c0_i32, %c0_i32_0 : i32, i32
  }
  func.func @transform_3(%arg0: i32) -> (i32, i32) {
    %c0_i32 = arith.constant 0 : i32
    %c0_i32_0 = arith.constant 0 : i32
    return %arg0, %c0_i32 : i32, i32
  }
}

</mosaic_0001>

<llo_original>
// kernel: tile.8
$region0: #{tile.8}
  #allocation0 [shape = 's32[1]{0}', space=sflag, size = 0x4, scoped, tag = 'scoped memory for tile.8']
  %s0 = inlined_call_operand.vmem [shape: f32[16], index: 0, kind: input, shape index: {}]
  %s1 = inlined_call_operand.vmem [shape: f32[8,16], index: 1, kind: output, shape index: {}]
  // Predicated region
  $region2: #{tile.8} parent=0 // pred_check
    _
  $region3: #{tile.8} parent=0 // pred_check_branch
    %3 = sbr.rel (0) target = $region5
  $region4: #{tile.8} parent=0 // pred_region
    _
  $region5: #{tile.8} parent=0 // pred_fallthru
    _
  %v4 = vld [vmem:[%s0] ss:$0 sm:$0xff]
  %5 = vst [vmem:[%s1] sm:$0xff] %v4

// kernel: tile.9
$region0: #{tile.9}
  %s0 = inlined_call_operand.vmem [shape: f32[8,16], index: 0, kind: input, shape index: {}]
  %s1 = inlined_call_operand.vmem [shape: f32[1,128], index: 1, kind: output, shape index: {}]
  $region1: #{tile.9} parent=0
    #allocation0 [shape = 'u8[4096]{0}', space=vmem, size = 0x1000, scoped, tag = 'scoped mem for output reshape']
    %v2 = vld [vmem:[%s0] sm:$0x1]
    %vm3 = vcmask 130048
    %4 = vst.msk [vmem:[#allocation0] sm:$0x1] %vm3, %v2
    %s5 = scalar_lea.vmem %s0, 7
    %v6 = vld [vmem:[%s5] sm:$0x1]
    %7 = vrot.lane.b32.xlu0 %v6, 112
    %v8 = vpop.permute.xlu0 %7
    %vm9 = vcmask 1048448
    %10 = vst.msk [vmem:[#allocation0] sm:$0x1] %vm9, %v8
    %s11 = scalar_lea.vmem %s0, 6
    %v12 = vld [vmem:[%s11] sm:$0x1]
    %13 = vrot.lane.b32.xlu0 %v12, 96
    %v14 = vpop.permute.xlu0 %13
    %vm15 = vcmask 917248
    %16 = vst.msk [vmem:[#allocation0] sm:$0x1] %vm15, %v14
    %s17 = scalar_lea.vmem %s0, 5
    %v18 = vld [vmem:[%s17] sm:$0x1]
    %19 = vrot.lane.b32.xlu0 %v18, 80
    %v20 = vpop.permute.xlu0 %19
    %vm21 = vcmask 786048
    %22 = vst.msk [vmem:[#allocation0] sm:$0x1] %vm21, %v20
    %s23 = scalar_lea.vmem %s0, 4
    %v24 = vld [vmem:[%s23] sm:$0x1]
    %25 = vrot.lane.b32.xlu0 %v24, 64
    %v26 = vpop.permute.xlu0 %25
    %vm27 = vcmask 654848
    %28 = vst.msk [vmem:[#allocation0] sm:$0x1] %vm27, %v26
    %s29 = scalar_lea.vmem %s0, 3
    %v30 = vld [vmem:[%s29] sm:$0x1]
    %31 = vrot.lane.b32.xlu0 %v30, 48
    %v32 = vpop.permute.xlu0 %31
    %vm33 = vcmask 523648
    %34 = vst.msk [vmem:[#allocation0] sm:$0x1] %vm33, %v32
    %s35 = scalar_lea.vmem %s0, 2
    %v36 = vld [vmem:[%s35] sm:$0x1]
    %37 = vrot.lane.b32.xlu0 %v36, 32
    %v38 = vpop.permute.xlu0 %37
    %vm39 = vcmask 392448
    %40 = vst.msk [vmem:[#allocation0] sm:$0x1] %vm39, %v38
    %s41 = scalar_lea.vmem %s0, 1
    %v42 = vld [vmem:[%s41] sm:$0x1]
    %43 = vrot.lane.b32.xlu0 %v42, 16
    %v44 = vpop.permute.xlu0 %43
    %vm45 = vcmask 261248
    %46 = vst.msk [vmem:[#allocation0] sm:$0x1] %vm45, %v44
    %s48 = sshllo.u32 0, 1
    %v50 = vld [vmem:[#allocation0] sm:%s48]
    %s51 = sshllo.u32 0, 1
    %52 = vst [vmem:[%s1] sm:%s51] %v50

// kernel: multi_head_attention_forward.1
$region0: #{multi_head_attention_forward.1}
  #allocation0 [shape = 'u32[]', space=smem, size = 0x4, offset = 0x4, fixed_abs, tag = 'smem constant byte address 0x4 - core index']
  #allocation1 [shape = 'u32[144,128]{1,0:T(1,128)}', space=vmem, size = 0x12000, scoped, tag = 'internal scratch']
  %s0 = inlined_call_operand.vmem [shape: f32[8,256], index: 0, kind: input, shape index: {}]
  %s1 = inlined_call_operand.vmem [shape: f32[256,128], index: 1, kind: input, shape index: {}]
  %s2 = inlined_call_operand.vmem [shape: f32[1,128], index: 2, kind: input, shape index: {}]
  %s3 = inlined_call_operand.vmem [shape: f32[8,128], index: 3, kind: output, shape index: {}]
  %s4 = sld [smem:[#allocation0]]
  $region22: #{multi_head_attention_forward.1} parent=0
    _
  %s6 = ssub.s32 1, %s4
  %s7 = scalar_select 0, %s6, %s4
  // Predicated region
  $region2: #{multi_head_attention_forward.1} parent=0 // pred_check
    _
  $region3: #{multi_head_attention_forward.1} parent=0 // pred_check_branch
    %9 = sbr.rel (0) target = $region5
  $region4: #{multi_head_attention_forward.1} parent=0 // pred_region
    _
  $region5: #{multi_head_attention_forward.1} parent=0 // pred_fallthru
    _
  // Predicated region
  $region6: #{multi_head_attention_forward.1} parent=0 // pred_check
    _
  $region7: #{multi_head_attention_forward.1} parent=0 // pred_check_branch
    %11 = sbr.rel (0) target = $region9
  $region8: #{multi_head_attention_forward.1} parent=0 // pred_region
    _
  $region9: #{multi_head_attention_forward.1} parent=0 // pred_fallthru
    _
  // Predicated region
  $region10: #{multi_head_attention_forward.1} parent=0 // pred_check
    _
  $region11: #{multi_head_attention_forward.1} parent=0 // pred_check_branch
    %13 = sbr.rel (0) target = $region13
  $region12: #{multi_head_attention_forward.1} parent=0 // pred_region
    _
  $region13: #{multi_head_attention_forward.1} parent=0 // pred_fallthru
    _
  %v14 = vld [vmem:[%s0] sm:$0xff]
  %v15 = vld [vmem:[%s0 + $0x8] sm:$0xff]
  %v16 = vld [vmem:[%s1] sm:$0xff]
  %v17 = vld [vmem:[%s1 + $0x8] sm:$0xff]
  %v18 = vld [vmem:[%s1 + $0x10] sm:$0xff]
  %v19 = vld [vmem:[%s1 + $0x18] sm:$0xff]
  %v20 = vld [vmem:[%s1 + $0x20] sm:$0xff]
  %v21 = vld [vmem:[%s1 + $0x28] sm:$0xff]
  %v22 = vld [vmem:[%s1 + $0x30] sm:$0xff]
  %v23 = vld [vmem:[%s1 + $0x38] sm:$0xff]
  %v24 = vld [vmem:[%s1 + $0x40] sm:$0xff]
  %v25 = vld [vmem:[%s1 + $0x48] sm:$0xff]
  %v26 = vld [vmem:[%s1 + $0x50] sm:$0xff]
  %v27 = vld [vmem:[%s1 + $0x58] sm:$0xff]
  %v28 = vld [vmem:[%s1 + $0x60] sm:$0xff]
  %v29 = vld [vmem:[%s1 + $0x68] sm:$0xff]
  %v30 = vld [vmem:[%s1 + $0x70] sm:$0xff]
  %v31 = vld [vmem:[%s1 + $0x78] sm:$0xff]
  %v32 = vld [vmem:[%s1 + $0x80] sm:$0xff]
  %v33 = vld [vmem:[%s1 + $0x88] sm:$0xff]
  %v34 = vld [vmem:[%s1 + $0x90] sm:$0xff]
  %v35 = vld [vmem:[%s1 + $0x98] sm:$0xff]
  %v36 = vld [vmem:[%s1 + $0xa0] sm:$0xff]
  %v37 = vld [vmem:[%s1 + $0xa8] sm:$0xff]
  %v38 = vld [vmem:[%s1 + $0xb0] sm:$0xff]
  %v39 = vld [vmem:[%s1 + $0xb8] sm:$0xff]
  %v40 = vld [vmem:[%s1 + $0xc0] sm:$0xff]
  %v41 = vld [vmem:[%s1 + $0xc8] sm:$0xff]
  %v42 = vld [vmem:[%s1 + $0xd0] sm:$0xff]
  %v43 = vld [vmem:[%s1 + $0xd8] sm:$0xff]
  %v44 = vld [vmem:[%s1 + $0xe0] sm:$0xff]
  %v45 = vld [vmem:[%s1 + $0xe8] sm:$0xff]
  %v46 = vld [vmem:[%s1 + $0xf0] sm:$0xff]
  %v47 = vld [vmem:[%s1 + $0xf8] sm:$0xff]
  %v48 = vld [vmem:[%s2] sm:$0x1]
  %v50 = vlaneseq
  %v51 = vshrl.u32 %v50, 7
  %v52 = vsub.s32 0, %v51
  %v53 = vrot.slane %v48, %v52
  %55 = vmatprep.subr.mxu0 0.0
  %56 = vmatpush1.msra.mxu0 %v16
  %57 = vmatprep.subr.mxu0 0.0
  %58 = vmatpush1.msra.mxu0 %v17
  %59 = vmatprep.subr.mxu0 0.0
  %60 = vmatpush1.msra.mxu0 %v18
  %61 = vmatprep.subr.mxu0 0.0
  %62 = vmatpush1.msra.mxu0 %v19
  %63 = vmatprep.subr.mxu0 0.0
  %64 = vmatpush1.msra.mxu0 %v20
  %65 = vmatprep.subr.mxu0 0.0
  %66 = vmatpush1.msra.mxu0 %v21
  %67 = vmatprep.subr.mxu0 0.0
  %68 = vmatpush1.msra.mxu0 %v22
  %69 = vmatprep.subr.mxu0 0.0
  %70 = vmatpush1.msra.mxu0 %v23
  %71 = vmatprep.subr.mxu0 0.0
  %72 = vmatpush1.msra.mxu0 %v24
  %73 = vmatprep.subr.mxu0 0.0
  %74 = vmatpush1.msra.mxu0 %v25
  %75 = vmatprep.subr.mxu0 0.0
  %76 = vmatpush1.msra.mxu0 %v26
  %77 = vmatprep.subr.mxu0 0.0
  %78 = vmatpush1.msra.mxu0 %v27
  %79 = vmatprep.subr.mxu0 0.0
  %80 = vmatpush1.msra.mxu0 %v28
  %81 = vmatprep.subr.mxu0 0.0
  %82 = vmatpush1.msra.mxu0 %v29
  %83 = vmatprep.subr.mxu0 0.0
  %84 = vmatpush1.msra.mxu0 %v30
  %85 = vmatprep.subr.mxu0 0.0
  %86 = vmatpush1.msra.mxu0 %v31
  %87 = vmatprep.subr.mxu0 0.0
  %88 = vmatpush1.msra.mxu0 %v32
  %89 = vmatprep.subr.mxu0 0.0
  %90 = vmatpush1.msra.mxu0 %v33
  %91 = vmatprep.subr.mxu0 0.0
  %92 = vmatpush1.msra.mxu0 %v34
  %93 = vmatprep.subr.mxu0 0.0
  %94 = vmatpush1.msra.mxu0 %v35
  %95 = vmatprep.subr.mxu0 0.0
  %96 = vmatpush1.msra.mxu0 %v36
  %97 = vmatprep.subr.mxu0 0.0
  %98 = vmatpush1.msra.mxu0 %v37
  %99 = vmatprep.subr.mxu0 0.0
  %100 = vmatpush1.msra.mxu0 %v38
  %101 = vmatprep.subr.mxu0 0.0
  %102 = vmatpush1.msra.mxu0 %v39
  %103 = vmatprep.subr.mxu0 0.0
  %104 = vmatpush1.msra.mxu0 %v40
  %105 = vmatprep.subr.mxu0 0.0
  %106 = vmatpush1.msra.mxu0 %v41
  %107 = vmatprep.subr.mxu0 0.0
  %108 = vmatpush1.msra.mxu0 %v42
  %109 = vmatprep.subr.mxu0 0.0
  %110 = vmatpush1.msra.mxu0 %v43
  %111 = vmatprep.subr.mxu0 0.0
  %112 = vmatpush1.msra.mxu0 %v44
  %113 = vmatprep.subr.mxu0 0.0
  %114 = vmatpush1.msra.mxu0 %v45
  %115 = vmatprep.subr.mxu0 0.0
  %116 = vmatpush1.msra.mxu0 %v46
  %117 = vmatprep.subr.mxu0 0.0
  %118 = vmatpush1.msra.mxu0 %v47
  %119 = vmatprep.mubr.f32.mxu0 %v15
  %120 = vmatmul.mubr.f32.gmra.mrb[0].mxu0 %v14
  %v121 = vpop.f32.mrb[0].mxu0
  %v122 = vadd.f32 %v53, %v121
  %v123 = vpop.f32.mrb[0].mxu0
  %124 = vdwg.mxu0
  %125 = vst [vmem:[%s3] sm:$0xff] %v122
  // Predicated region
  $region14: #{multi_head_attention_forward.1} parent=0 // pred_check
    _
  $region15: #{multi_head_attention_forward.1} parent=0 // pred_check_branch
    %127 = sbr.rel (0) target = $region17
  $region16: #{multi_head_attention_forward.1} parent=0 // pred_region
    _
  $region17: #{multi_head_attention_forward.1} parent=0 // pred_fallthru
    _
  // Predicated region
  $region18: #{multi_head_attention_forward.1} parent=0 // pred_check
    _
  $region19: #{multi_head_attention_forward.1} parent=0 // pred_check_branch
    %129 = sbr.rel (0) target = $region21
  $region20: #{multi_head_attention_forward.1} parent=0 // pred_region
    _
  $region21: #{multi_head_attention_forward.1} parent=0 // pred_fallthru
    _

</llo_original>
